<compile_context>
chip_gen: v7x
topology: tpu7x:2x2x1
jax: 0.10.0
libtpu: 0.0.40
codegen_flags: <defaults>
</compile_context>

<pallas_src>
import math
import functools

import jax
import jax.numpy as jnp
from jax.experimental import pallas as pl
from jax.experimental.pallas import tpu as pltpu

_LANE = 128


def _round_up(x, m):
    return ((x + m - 1) // m) * m


def _largest_dividing_tile(padded, max_tile, unit=_LANE):
    """Largest multiple of `unit` that divides `padded` and is <= max_tile."""
    m = padded // unit
    cap = max(1, min(m, max_tile // unit))
    for d in range(cap, 0, -1):
        if m % d == 0:
            return d * unit
    return unit


def _softmax_first_part_kernel(f_ref, wt_ref, b_ref, o_ref, acc_ref,
                               *, inv_temperature, compute_dtype):
    # f_ref : [tm, tk]  features tile
    # wt_ref: [tk, tn]  pre-transposed (and pre-cast) weight tile
    # b_ref : [1,  tn]  bias tile (f32)
    # o_ref : [tm, tn]  output logits tile
    # acc_ref: [tm, tn] f32 accumulator scratch, resident across the K axis
    k = pl.program_id(2)

    f = f_ref[...]
    w = wt_ref[...]
    if compute_dtype is not None:           # in-kernel cast: no extra XLA HBM pass
        if f.dtype != compute_dtype:
            f = f.astype(compute_dtype)
        if w.dtype != compute_dtype:
            w = w.astype(compute_dtype)

    contrib = jnp.dot(f, w, preferred_element_type=jnp.float32)

    @pl.when(k == 0)
    def _():
        acc_ref[...] = contrib              # direct assign: no zero-init store+reload

    @pl.when(k > 0)
    def _():
        acc_ref[...] += contrib

    @pl.when(k == pl.num_programs(2) - 1)
    def _():
        logits = acc_ref[...] + b_ref[...]                     # f32 bias add
        o_ref[...] = (logits * inv_temperature).astype(o_ref.dtype)


def prepare_params(weights, bias, *, compute_dtype=None):
    """One-time weight prep (hoisted out of the per-forward path).

    weights: [C, F], bias: [C].
    Returns (weights_t [Fp, Cp], bias_row [1, Cp] f32) with Fp, Cp multiples of 128,
    weights optionally stored in `compute_dtype` (e.g. bf16).
    """
    C, F = weights.shape
    Fp = _round_up(F, _LANE)
    Cp = _round_up(C, _LANE)

    wt = jnp.transpose(weights)                               # [F, C]
    if (Fp, Cp) != (F, C):
        wt = jnp.pad(wt, ((0, Fp - F), (0, Cp - C)))
    if compute_dtype is not None:
        wt = wt.astype(compute_dtype)

    b = bias.astype(jnp.float32)
    if Cp != C:
        b = jnp.pad(b, (0, Cp - C))
    return wt, b.reshape(1, Cp)


def softmax_loss_first_part(
    features,          # [B, F]   (NOT pre-cast; optional cast happens in-kernel)
    weights_t,         # [Fp, Cp] from prepare_params
    bias_row,          # [1, Cp]  from prepare_params (f32)
    *,
    num_classes,
    temperature=1.0,
    compute_dtype=None,   # e.g. jnp.bfloat16 (recommended on v5e/v6e/v7x); None = input dtype
    tm=None,
    tn=None,
    tk=None,
):
    """Returns logits [B, num_classes] = (features @ W.T + bias) / temperature."""
    B, F = features.shape
    Fp, Cp = weights_t.shape
    assert _round_up(F, _LANE) == Fp, "weights_t feature padding mismatch"
    assert bias_row.shape == (1, Cp), "bias_row shape mismatch"
    assert num_classes <= Cp

    out_dtype = features.dtype

    # Sublane packing multiple for the batch tile (bf16 packs 16 rows, fp8/int8 32).
    cdt = compute_dtype if compute_dtype is not None else features.dtype
    itemsize = jnp.dtype(cdt).itemsize
    sub = 8 if itemsize >= 4 else (16 if itemsize == 2 else 32)

    # ---- Tile selection: lane-dense multiples of 128 that DIVIDE the padded extents
    # (padding is decoupled from tile size -> no wasted MXU work, no output slice
    # copy when C is already a multiple of 128).
    if tk is None:
        tk = _largest_dividing_tile(Fp, 1024)
    if tn is None:
        tn = _largest_dividing_tile(Cp, 1024)
    if tm is None:
        tm = min(1024, _round_up(B, sub))

    # v7x megacore: make sure the 'parallel' sub-grid has >= 2 tiles when possible.
    Bp = _round_up(B, tm)
    if (Bp // tm) * (Cp // tn) == 1:
        if tn >= 2 * _LANE and (tn // 2) % _LANE == 0 and Cp % (tn // 2) == 0:
            tn //= 2
        elif tm >= 2 * sub and (tm // 2) % sub == 0:
            tm //= 2

    # ---- VMEM budget derived from tile sizes (double-buffered inputs + output
    # + f32 accumulator), kept <= ~44 MiB for headroom under v7x's 64 MiB.
    f_bytes = jnp.dtype(features.dtype).itemsize
    w_bytes = jnp.dtype(weights_t.dtype).itemsize
    o_bytes = jnp.dtype(out_dtype).itemsize

    def vmem_bytes(tm_, tn_, tk_):
        return (2 * (tm_ * tk_ * f_bytes + tk_ * tn_ * w_bytes + tn_ * 4)
                + 2 * tm_ * tn_ * o_bytes + tm_ * tn_ * 4)

    budget = 44 * 1024 * 1024
    while vmem_bytes(tm, tn, tk) > budget:
        if tk > 512 and (tk // 2) % _LANE == 0 and Fp % (tk // 2) == 0:
            tk //= 2
        elif tm > 256 and (tm // 2) % sub == 0:
            tm //= 2
        elif tn > _LANE and (tn // 2) % _LANE == 0 and Cp % (tn // 2) == 0:
            tn //= 2
        elif tm > sub and (tm // 2) % sub == 0:
            tm //= 2
        elif tk > _LANE and (tk // 2) % _LANE == 0 and Fp % (tk // 2) == 0:
            tk //= 2
        else:
            break

    Bp = _round_up(B, tm)
    vmem_limit = int(max(vmem_bytes(tm, tn, tk) + (4 << 20), 16 << 20))

    # Per-call pad only on the (cheap) activation side: B up to tm, F up to <128 cols.
    if (Bp, Fp) != (B, F):
        features = jnp.pad(features, ((0, Bp - B), (0, Fp - F)))

    grid = (Bp // tm, Cp // tn, Fp // tk)

    kernel = functools.partial(
        _softmax_first_part_kernel,
        inv_temperature=1.0 / float(temperature),
        compute_dtype=compute_dtype,
    )

    out = pl.pallas_call(
        kernel,
        out_shape=jax.ShapeDtypeStruct((Bp, Cp), out_dtype),
        grid_spec=pltpu.PrefetchScalarGridSpec(
            num_scalar_prefetch=0,
            grid=grid,
            in_specs=[
                pl.BlockSpec((tm, tk), lambda i, j, k: (i, k)),   # features tile
                pl.BlockSpec((tk, tn), lambda i, j, k: (k, j)),   # W.T tile
                pl.BlockSpec((1, tn), lambda i, j, k: (0, j)),    # bias tile (f32)
            ],
            out_specs=pl.BlockSpec((tm, tn), lambda i, j, k: (i, j)),
            scratch_shapes=[pltpu.VMEM((tm, tn), jnp.float32)],
        ),
        compiler_params=pltpu.CompilerParams(
            dimension_semantics=("parallel", "parallel", "arbitrary"),
            vmem_limit_bytes=vmem_limit,
        ),
    )(features, weights_t, bias_row)

    if Bp != B or Cp != num_classes:
        out = out[:B, :num_classes]
    return out


if __name__ == "__main__":
    # Small shapes consistent with the module: batch=16, num_features=32, num_classes=16.
    B, num_features, num_classes = 16, 32, 16
    temperature = 1.0

    key = jax.random.PRNGKey(0)
    k_feat, k_w = jax.random.split(key)

    # Deterministic init matching nn.init.uniform_(-sqrt(1/F), sqrt(1/F)), zeros bias.
    bound = math.sqrt(1.0 / num_features)
    weights = jax.random.uniform(
        k_w, (num_classes, num_features), dtype=jnp.float32,
        minval=-bound, maxval=bound,
    )
    bias = jnp.zeros((num_classes,), dtype=jnp.float32)
    features = jax.random.normal(k_feat, (B, num_features), dtype=jnp.float32)

    ref = (features @ weights.T + bias) / temperature

    # --- f32 path: exact match with the PyTorch forward semantics.
    wt_f32, bias_row = prepare_params(weights, bias)          # one-time weight prep
    logits = softmax_loss_first_part(
        features, wt_f32, bias_row,
        num_classes=num_classes, temperature=temperature,
    )
    logits = jax.block_until_ready(logits)
    assert logits.shape == (B, num_classes)
    assert jnp.allclose(logits, ref, atol=1e-5, rtol=1e-5)

    # --- bf16 compute path (recommended on v5e/v6e/v7x); weights stored bf16 at prep
    # time, features cast in-kernel, f32 accumulation / bias / scaling inside.
    wt_bf16, bias_row_bf = prepare_params(weights, bias, compute_dtype=jnp.bfloat16)
    logits_bf16 = softmax_loss_first_part(
        features, wt_bf16, bias_row_bf,
        num_classes=num_classes, temperature=temperature,
        compute_dtype=jnp.bfloat16,
    )
    logits_bf16 = jax.block_until_ready(logits_bf16)
    assert jnp.allclose(logits_bf16, ref, atol=5e-2, rtol=5e-2)

    print("KERNEL_OK")
</pallas_src>

<mosaic_0001>
module attributes {stable_mosaic.version = 11 : i64} {
  func.func @_softmax_first_part_kernel(%arg0: i32, %arg1: i32, %arg2: i32, %arg3: memref<8x128xf32, #tpu.memory_space<vmem>>, %arg4: memref<128x128xf32, #tpu.memory_space<vmem>>, %arg5: memref<1x128xf32, #tpu.memory_space<vmem>>, %arg6: memref<8x128xf32, #tpu.memory_space<vmem>>, %arg7: memref<8x128xf32, #tpu.memory_space<vmem>>) attributes {dimension_semantics = [#tpu.dimension_semantics<parallel>, #tpu.dimension_semantics<parallel>, #tpu.dimension_semantics<arbitrary>], iteration_bounds = array<i64: 2, 1, 1>, scalar_prefetch = 0 : i64, scratch_operands = 1 : i64, tpu.core_type = #tpu.core_type<tc>, window_params = [{transform_indices = @transform_0, window_bounds = array<i64: 8, 128>}, {transform_indices = @transform_1, window_bounds = array<i64: 128, 128>}, {transform_indices = @transform_2, window_bounds = array<i64: 1, 128>}, {transform_indices = @transform_3, window_bounds = array<i64: 8, 128>}]} {
    %c0 = arith.constant 0 : index
    %c0_0 = arith.constant 0 : index
    %0 = vector.load %arg3[%c0, %c0_0] : memref<8x128xf32, #tpu.memory_space<vmem>>, vector<8x128xf32>
    %c0_1 = arith.constant 0 : index
    %c0_2 = arith.constant 0 : index
    %1 = vector.load %arg4[%c0_1, %c0_2] : memref<128x128xf32, #tpu.memory_space<vmem>>, vector<128x128xf32>
    %cst = arith.constant dense<0.000000e+00> : vector<8x128xf32>
    %2 = tpu.matmul %0, %1, %cst {dimension_numbers = #tpu.dot_dimension_numbers<[1], [0], [0], [1], [0, 0, 1, 1], [], []>} : vector<8x128xf32>, vector<128x128xf32>, vector<8x128xf32> -> vector<8x128xf32>
    %c0_i32 = arith.constant 0 : i32
    %3 = arith.cmpi eq, %arg2, %c0_i32 : i32
    %4 = arith.extui %3 : i1 to i32
    %c0_i32_3 = arith.constant 0 : i32
    %5 = arith.cmpi ne, %4, %c0_i32_3 : i32
    scf.if %5 {
      %c0_8 = arith.constant 0 : index
      %c0_9 = arith.constant 0 : index
      %12 = vector.load %arg7[%c0_8, %c0_9] : memref<8x128xf32, #tpu.memory_space<vmem>>, vector<8x128xf32>
      tpu.vector_store %arg7[%c0_8, %c0_9], %2 {strides = array<i32>} : memref<8x128xf32, #tpu.memory_space<vmem>>, vector<8x128xf32>,
    } else {
    }
    %c0_i32_4 = arith.constant 0 : i32
    %6 = arith.cmpi sgt, %arg2, %c0_i32_4 : i32
    %7 = arith.extui %6 : i1 to i32
    %c0_i32_5 = arith.constant 0 : i32
    %8 = arith.cmpi ne, %7, %c0_i32_5 : i32
    scf.if %8 {
      %c0_8 = arith.constant 0 : index
      %c0_9 = arith.constant 0 : index
      %12 = vector.load %arg7[%c0_8, %c0_9] : memref<8x128xf32, #tpu.memory_space<vmem>>, vector<8x128xf32>
      %13 = arith.addf %12, %2 : vector<8x128xf32>
      %c0_10 = arith.constant 0 : index
      %c0_11 = arith.constant 0 : index
      %14 = vector.load %arg7[%c0_10, %c0_11] : memref<8x128xf32, #tpu.memory_space<vmem>>, vector<8x128xf32>
      tpu.vector_store %arg7[%c0_10, %c0_11], %13 {strides = array<i32>} : memref<8x128xf32, #tpu.memory_space<vmem>>, vector<8x128xf32>,
    } else {
    }
    %c0_i32_6 = arith.constant 0 : i32
    %9 = arith.cmpi eq, %arg2, %c0_i32_6 : i32
    %10 = arith.extui %9 : i1 to i32
    %c0_i32_7 = arith.constant 0 : i32
    %11 = arith.cmpi ne, %10, %c0_i32_7 : i32
    scf.if %11 {
      %c0_8 = arith.constant 0 : index
      %c0_9 = arith.constant 0 : index
      %12 = vector.load %arg7[%c0_8, %c0_9] : memref<8x128xf32, #tpu.memory_space<vmem>>, vector<8x128xf32>
      %c0_10 = arith.constant 0 : index
      %c0_11 = arith.constant 0 : index
      %13 = vector.load %arg5[%c0_10, %c0_11] : memref<1x128xf32, #tpu.memory_space<vmem>>, vector<1x128xf32>
      %14 = vector.broadcast %13 : vector<1x128xf32> to vector<8x128xf32>
      %15 = arith.addf %12, %14 : vector<8x128xf32>
      %cst_12 = arith.constant 1.000000e+00 : f32
      %16 = vector.broadcast %cst_12 : f32 to vector<8x128xf32>
      %17 = arith.mulf %15, %16 : vector<8x128xf32>
      %c0_13 = arith.constant 0 : index
      %c0_14 = arith.constant 0 : index
      %18 = vector.load %arg6[%c0_13, %c0_14] : memref<8x128xf32, #tpu.memory_space<vmem>>, vector<8x128xf32>
      tpu.vector_store %arg6[%c0_13, %c0_14], %17 {strides = array<i32>} : memref<8x128xf32, #tpu.memory_space<vmem>>, vector<8x128xf32>,
    } else {
    }
    return
  }
  func.func @transform_0(%arg0: i32, %arg1: i32, %arg2: i32) -> (i32, i32) {
    %c0_i32 = arith.constant 0 : i32
    return %arg0, %arg2 : i32, i32
  }
  func.func @transform_1(%arg0: i32, %arg1: i32, %arg2: i32) -> (i32, i32) {
    %c0_i32 = arith.constant 0 : i32
    return %arg2, %arg1 : i32, i32
  }
  func.func @transform_2(%arg0: i32, %arg1: i32, %arg2: i32) -> (i32, i32) {
    %c0_i32 = arith.constant 0 : i32
    %c0_i32_0 = arith.constant 0 : i32
    return %c0_i32, %arg1 : i32, i32
  }
  func.func @transform_3(%arg0: i32, %arg1: i32, %arg2: i32) -> (i32, i32) {
    %c0_i32 = arith.constant 0 : i32
    return %arg0, %arg1 : i32, i32
  }
}

</mosaic_0001>

<llo_original>
// kernel: tpu_custom_call.1
$region0: #{tpu_custom_call.1}
  #allocation0 [shape = 'u32[]', space=smem, size = 0x4, offset = 0x4, fixed_abs, tag = 'smem constant byte address 0x4 - core index']
  #allocation1 [shape = 'u32[144,128]{1,0:T(1,128)}', space=vmem, size = 0x12000, scoped, tag = 'internal scratch']
  #allocation2 [shape = 'f32[8,128]{1,0:T(8,128)}', space=vmem, size = 0x1000, scoped, tag = 'scratch operand']
  %s0 = inlined_call_operand.hbm [shape: f32[16,128], index: 0, kind: input, shape index: {}]
  %s1 = inlined_call_operand.hbm [shape: f32[128,128], index: 1, kind: input, shape index: {}]
  %s2 = inlined_call_operand.vmem [shape: f32[1,128], index: 2, kind: input, shape index: {}]
  %s3 = inlined_call_operand.hbm [shape: f32[16,128], index: 3, kind: output, shape index: {}]
  %s4 = sld [smem:[#allocation0]]
  $region65: #{tpu_custom_call.1} parent=0
    _
  %s6 = ssub.s32 1, %s4
  %s7 = scalar_select 0, %s6, %s4
  $region1: #{tpu_custom_call.1} parent=0
    #allocation3 [shape = 'u8[8192]{0}', space=vmem, size = 0x2000, scoped, tag = 'input window, operand 0']
    #allocation4 [shape = 's32[2]{0}', space=sflag, size = 0x8, scoped, tag = 'scoped memory for tpu_custom_call.1']
    #allocation5 [shape = 's32[2]{0}', space=sflag, size = 0x8, scoped, tag = 'scoped memory for tpu_custom_call.1']
    #allocation6 [shape = 'u8[65536]{0}', space=vmem, size = 0x10000, scoped, tag = 'input window, operand 1, single buffered']
    #allocation7 [shape = 's32[1]{0}', space=sflag, size = 0x4, scoped, tag = 'scoped memory for tpu_custom_call.1']
    #allocation8 [shape = 'u8[8192]{0}', space=vmem, size = 0x2000, scoped, tag = 'output window, operand 0']
    %8 = vsyncpa [#allocation4], 0
    %s9 = scalar_lea.sflag [#allocation4], 1
    %10 = vsyncpa %s9, 0
    %11 = vsyncpa [#allocation7], 0
    %12 = vsyncpa [#allocation5], 0
    %s13 = scalar_lea.sflag [#allocation5], 1
    %14 = vsyncpa %s13, 0
    loop: start=0, step=1, limit=4
    $region2: #{tpu_custom_call.1} parent=1 // loop_pre_header
      _
    $region3: #{tpu_custom_call.1} parent=1 // loop_header
      %s16 = sphi 0, %s20
      %p17 = scmp.ge.s32.totalorder %s16, 4
      %s23 = sphi 0, %s42
      %s24 = sphi 0, %s38
      %s25 = sphi 0, %s34
      %s26 = sphi 0, %s23
      %s27 = sphi 0, %s24
      %s28 = sphi 0, %s25
      %s29 = sphi 0, %s26
      %s30 = sphi 0, %s27
      %s31 = sphi 0, %s28
      %s47 = sphi 0, %s49
      %s50 = sphi 0, %s47
      %s51 = sphi 0, %s50
      %s67 = sphi 0, %s51
      %s75 = sphi 0, %s77
      %s78 = sphi 0, %s75
      %s79 = sphi 0, %s78
      %s95 = sphi 0, %s79
      %s101 = sphi 0, %s103
      %s104 = sphi 0, %s101
      %s105 = sphi 0, %s104
      %s121 = sphi 0, %s105
      %s129 = sphi 0, %s131
      %s132 = sphi 0, %s129
      %s133 = sphi 0, %s132
      %s149 = sphi 0, %s133
    $region4: #{tpu_custom_call.1} parent=1 // loop_header_branch
      %19 = sbr.rel (%p17) target = $region8
    $region5: #{tpu_custom_call.1} parent=1 // loop_body
      %s21 = ssub.s32 %s16, 1
      %s22 = ssub.s32 %s16, 2
      %s32 = sadd.s32 1, %s25
      %p33 = scmp.ge.s32.totalorder %s32, 1
      %s34 = scalar_select %p33, 0, %s32
      %s35 = sadd.s32 1, %s24
      %s36 = scalar_select %p33, %s35, %s24
      %p37 = scmp.ge.s32.totalorder %s36, 1
      %s38 = scalar_select %p37, 0, %s36
      %s39 = sadd.s32 1, %s23
      %s40 = scalar_select %p37, %s39, %s23
      %p41 = scmp.ge.s32.totalorder %s40, 2
      %s42 = scalar_select %p41, 0, %s40
      %s43 = ssub.s32 %s23, %s42
      %s44 = ssub.s32 %s25, %s34
      %s45 = sor.u32 %s43, %s44
      %p46 = scmp.eq.s32.totalorder %s45, 0
      %s48 = sadd.s32 %s47, 1
      %s49 = scalar_select %p46, %s47, %s48
      %p52 = pneg %p46
      %p53 = scmp.eq.s32.totalorder %s16, 1
      %p54 = por %p52, %p53
      %p55 = scmp.ne.s32.totalorder %s47, %s50
      %p56 = scmp.eq.s32.totalorder %s16, 0
      %p57 = por %p55, %p56
      %p58 = scmp.ne.s32.totalorder %s47, %s50
      %p59 = scmp.eq.s32.totalorder %s21, 1
      %p60 = por %p58, %p59
      %p61 = scmp.ne.s32.totalorder %s50, %s51
      %p62 = scmp.eq.s32.totalorder %s21, 0
      %p63 = por %p61, %p62
      %p64 = scmp.ne.s32.totalorder %s50, %s51
      %p65 = scmp.eq.s32.totalorder %s22, 1
      %p66 = por %p64, %p65
      %p68 = scmp.ne.s32.totalorder %s51, %s67
      %p69 = scmp.eq.s32.totalorder %s22, 0
      %p70 = por %p68, %p69
      %s71 = ssub.s32 %s25, %s34
      %s72 = ssub.s32 %s24, %s38
      %s73 = sor.u32 %s71, %s72
      %p74 = scmp.eq.s32.totalorder %s73, 0
      %s76 = sadd.s32 %s75, 1
      %s77 = scalar_select %p74, %s75, %s76
      %p80 = pneg %p74
      %p81 = scmp.eq.s32.totalorder %s16, 1
      %p82 = por %p80, %p81
      %p83 = scmp.ne.s32.totalorder %s75, %s78
      %p84 = scmp.eq.s32.totalorder %s16, 0
      %p85 = por %p83, %p84
      %p86 = scmp.ne.s32.totalorder %s75, %s78
      %p87 = scmp.eq.s32.totalorder %s21, 1
      %p88 = por %p86, %p87
      %p89 = scmp.ne.s32.totalorder %s78, %s79
      %p90 = scmp.eq.s32.totalorder %s21, 0
      %p91 = por %p89, %p90
      %p92 = scmp.ne.s32.totalorder %s78, %s79
      %p93 = scmp.eq.s32.totalorder %s22, 1
      %p94 = por %p92, %p93
      %p96 = scmp.ne.s32.totalorder %s79, %s95
      %p97 = scmp.eq.s32.totalorder %s22, 0
      %p98 = por %p96, %p97
      %s99 = ssub.s32 %s24, %s38
      %p100 = scmp.eq.s32.totalorder %s99, 0
      %s102 = sadd.s32 %s101, 1
      %s103 = scalar_select %p100, %s101, %s102
      %p106 = pneg %p100
      %p107 = scmp.eq.s32.totalorder %s16, 1
      %p108 = por %p106, %p107
      %p109 = scmp.ne.s32.totalorder %s101, %s104
      %p110 = scmp.eq.s32.totalorder %s16, 0
      %p111 = por %p109, %p110
      %p112 = scmp.ne.s32.totalorder %s101, %s104
      %p113 = scmp.eq.s32.totalorder %s21, 1
      %p114 = por %p112, %p113
      %p115 = scmp.ne.s32.totalorder %s104, %s105
      %p116 = scmp.eq.s32.totalorder %s21, 0
      %p117 = por %p115, %p116
      %p118 = scmp.ne.s32.totalorder %s104, %s105
      %p119 = scmp.eq.s32.totalorder %s22, 1
      %p120 = por %p118, %p119
      %p122 = scmp.ne.s32.totalorder %s105, %s121
      %p123 = scmp.eq.s32.totalorder %s22, 0
      %p124 = por %p122, %p123
      %s125 = ssub.s32 %s23, %s42
      %s126 = ssub.s32 %s24, %s38
      %s127 = sor.u32 %s125, %s126
      %p128 = scmp.eq.s32.totalorder %s127, 0
      %s130 = sadd.s32 %s129, 1
      %s131 = scalar_select %p128, %s129, %s130
      %p134 = pneg %p128
      %p135 = scmp.eq.s32.totalorder %s16, 1
      %p136 = por %p134, %p135
      %p137 = scmp.ne.s32.totalorder %s129, %s132
      %p138 = scmp.eq.s32.totalorder %s16, 0
      %p139 = por %p137, %p138
      %p140 = scmp.ne.s32.totalorder %s129, %s132
      %p141 = scmp.eq.s32.totalorder %s21, 1
      %p142 = por %p140, %p141
      %p143 = scmp.ne.s32.totalorder %s132, %s133
      %p144 = scmp.eq.s32.totalorder %s21, 0
      %p145 = por %p143, %p144
      %p146 = scmp.ne.s32.totalorder %s132, %s133
      %p147 = scmp.eq.s32.totalorder %s22, 1
      %p148 = por %p146, %p147
      %p150 = scmp.ne.s32.totalorder %s133, %s149
      %p151 = scmp.eq.s32.totalorder %s22, 0
      %p152 = por %p150, %p151
      %p153 = scmp.le.s32.totalorder 1, %s16
      %p154 = scmp.lt.s32.totalorder %s16, 3
      %p155 = pnand %p153, %p154
      %p156 = pneg %p155
      // Predicated region
      $region9: #{tpu_custom_call.1} parent=5 // pred_check
        _
      $region10: #{tpu_custom_call.1} parent=5 // pred_check_branch
        %158 = sbr.rel (%p155) target = $region12
      $region11: #{tpu_custom_call.1} parent=5 // pred_region
        %s159 = ssub.s32 %s16, 1
        // Predicated region
        $region13: #{tpu_custom_call.1} parent=11 // pred_check
          %p160 = pneg %p91
        $region14: #{tpu_custom_call.1} parent=11 // pred_check_branch
          %162 = sbr.rel (%p160) target = $region16
        $region15: #{tpu_custom_call.1} parent=11 // pred_region
          %s163 = smul.u32 16, %s28
          %s165 = ssub.s32 2048, 2048
          %166 = vsyncadd [#allocation7], %s165
          %s167 = sadd.s32 %s27, %s163
          %s168 = smul.addr %s167, 128
          %s169 = scalar_lea.hbm %s1, %s168
          %s170 = sshll.u32 [#allocation6], 4
          %s171 = int_to_ptr.vmem [resolvable:$true] %s170
          %176 = dma.hbm_to_vmem [thread:$0]  %s169, 2048, %s171, [#allocation7], 128, 128, 8
        $region16: #{tpu_custom_call.1} parent=11 // pred_fallthru
          _
        // Predicated region
        $region17: #{tpu_custom_call.1} parent=11 // pred_check
          %p177 = pneg %p117
        $region18: #{tpu_custom_call.1} parent=11 // pred_check_branch
          %179 = sbr.rel (%p177) target = $region20
        $region19: #{tpu_custom_call.1} parent=11 // pred_region
          %p180 = scmp.lt.s32.totalorder %s27, 0
          %s181 = scalar_select %p180, %s27, 0
          %s182 = scalar_lea.vmem %s2, %s181
        $region20: #{tpu_custom_call.1} parent=11 // pred_fallthru
          _
      $region12: #{tpu_custom_call.1} parent=5 // pred_fallthru
        _
      %p183 = scmp.lt.s32.totalorder %s16, 2
      // Predicated region
      $region21: #{tpu_custom_call.1} parent=5 // pred_check
        %p184 = pneg %p183
      $region22: #{tpu_custom_call.1} parent=5 // pred_check_branch
        %186 = sbr.rel (%p184) target = $region24
      $region23: #{tpu_custom_call.1} parent=5 // pred_region
        // Predicated region
        $region25: #{tpu_custom_call.1} parent=23 // pred_check
          %p187 = pneg %p57
        $region26: #{tpu_custom_call.1} parent=23 // pred_check_branch
          %189 = sbr.rel (%p187) target = $region28
        $region27: #{tpu_custom_call.1} parent=23 // pred_region
          %s190 = sand.u32 %s47, 1
          %s191 = scalar_lea.sflag [#allocation4], %s190
          %s192 = sand.u32 %s47, 1
          %s193 = smul.addr %s192, 8
          %s194 = scalar_lea.vmem [#allocation3], %s193
          %s196 = ssub.s32 128, 128
          %197 = vsyncadd %s191, %s196
          %s198 = sadd.s32 %s25, %s23
          %s199 = smul.addr %s198, 128
          %s200 = scalar_lea.hbm %s0, %s199
          %s202 = sshll.u32 %s194, 4
          %s203 = int_to_ptr.vmem [resolvable:$true] %s202
          %205 = dma.hbm_to_vmem [thread:$0]  %s200, 128, %s203, %s191
        $region28: #{tpu_custom_call.1} parent=23 // pred_fallthru
          _
      $region24: #{tpu_custom_call.1} parent=5 // pred_fallthru
        _
      %p206 = scmp.le.s32.totalorder 1, %s16
      %p207 = scmp.lt.s32.totalorder %s16, 3
      %p208 = pnand %p206, %p207
      %p209 = pneg %p208
      // Predicated region
      $region29: #{tpu_custom_call.1} parent=5 // pred_check
        _
      $region30: #{tpu_custom_call.1} parent=5 // pred_check_branch
        %211 = sbr.rel (%p208) target = $region32
      $region31: #{tpu_custom_call.1} parent=5 // pred_region
        %s212 = ssub.s32 %s16, 1
        %s213 = sand.u32 %s50, 1
        %s214 = scalar_lea.sflag [#allocation4], %s213
        %s215 = sand.u32 %s50, 1
        %s216 = smul.addr %s215, 8
        %s217 = scalar_lea.vmem [#allocation3], %s216
        // Predicated region
        $region33: #{tpu_custom_call.1} parent=31 // pred_check
          %p218 = pneg %p63
        $region34: #{tpu_custom_call.1} parent=31 // pred_check_branch
          %220 = sbr.rel (%p218) target = $region36
        $region35: #{tpu_custom_call.1} parent=31 // pred_region
          %221 = dma.done %s214, 128
        $region36: #{tpu_custom_call.1} parent=31 // pred_fallthru
          _
        // Predicated region
        $region37: #{tpu_custom_call.1} parent=31 // pred_check
          %p222 = pneg %p91
        $region38: #{tpu_custom_call.1} parent=31 // pred_check_branch
          %224 = sbr.rel (%p222) target = $region40
        $region39: #{tpu_custom_call.1} parent=31 // pred_region
          %225 = dma.done [#allocation7], 2048
        $region40: #{tpu_custom_call.1} parent=31 // pred_fallthru
          _
        %s226 = sand.u32 %s50, 1
        %s227 = scalar_lea.sflag [#allocation4], %s226
        %s228 = sand.u32 %s50, 1
        %s229 = smul.addr %s228, 8
        %s230 = scalar_lea.vmem [#allocation3], %s229
        %p231 = pneg %p63
        %p232 = pneg %p60
        %p233 = pneg %p91
        %p234 = pneg %p88
        %p235 = scmp.lt.s32.totalorder %s27, 0
        %s236 = scalar_select %p235, %s27, 0
        %s237 = scalar_lea.vmem %s2, %s236
        %p238 = pneg %p117
        %p239 = pneg %p114
        %p240 = pneg %p145
        %p241 = pneg %p142
        %s242 = sand.u32 %s132, 1
        %s243 = scalar_lea.sflag [#allocation5], %s242
        %s244 = sand.u32 %s132, 1
        %s245 = smul.addr %s244, 8
        %s246 = scalar_lea.vmem [#allocation8], %s245
        %s247 = smul.u32 16, %s28
        %p248 = scmp.lt.s32.totalorder %s27, 0
        %s249 = scalar_select %p248, %s27, 0
        %s250 = scalar_lea.vmem %s2, %s249
        %v251 = vld [vmem:[%s217] sm:$0xff]
        %v252 = vld [vmem:[#allocation6] sm:$0xff]
        %v253 = vld [vmem:[#allocation6 + $0x8] sm:$0xff]
        %v254 = vld [vmem:[#allocation6 + $0x10] sm:$0xff]
        %v255 = vld [vmem:[#allocation6 + $0x18] sm:$0xff]
        %v256 = vld [vmem:[#allocation6 + $0x20] sm:$0xff]
        %v257 = vld [vmem:[#allocation6 + $0x28] sm:$0xff]
        %v258 = vld [vmem:[#allocation6 + $0x30] sm:$0xff]
        %v259 = vld [vmem:[#allocation6 + $0x38] sm:$0xff]
        %v260 = vld [vmem:[#allocation6 + $0x40] sm:$0xff]
        %v261 = vld [vmem:[#allocation6 + $0x48] sm:$0xff]
        %v262 = vld [vmem:[#allocation6 + $0x50] sm:$0xff]
        %v263 = vld [vmem:[#allocation6 + $0x58] sm:$0xff]
        %v264 = vld [vmem:[#allocation6 + $0x60] sm:$0xff]
        %v265 = vld [vmem:[#allocation6 + $0x68] sm:$0xff]
        %v266 = vld [vmem:[#allocation6 + $0x70] sm:$0xff]
        %v267 = vld [vmem:[#allocation6 + $0x78] sm:$0xff]
        %268 = vmatprep.subr.mxu0 0.0
        %269 = vmatpush1.msra.mxu0 %v252
        %270 = vmatprep.subr.mxu0 0.0
        %271 = vmatpush1.msra.mxu0 %v253
        %272 = vmatprep.subr.mxu0 0.0
        %273 = vmatpush1.msra.mxu0 %v254
        %274 = vmatprep.subr.mxu0 0.0
        %275 = vmatpush1.msra.mxu0 %v255
        %276 = vmatprep.subr.mxu0 0.0
        %277 = vmatpush1.msra.mxu0 %v256
        %278 = vmatprep.subr.mxu0 0.0
        %279 = vmatpush1.msra.mxu0 %v257
        %280 = vmatprep.subr.mxu0 0.0
        %281 = vmatpush1.msra.mxu0 %v258
        %282 = vmatprep.subr.mxu0 0.0
        %283 = vmatpush1.msra.mxu0 %v259
        %284 = vmatprep.subr.mxu0 0.0
        %285 = vmatpush1.msra.mxu0 %v260
        %286 = vmatprep.subr.mxu0 0.0
        %287 = vmatpush1.msra.mxu0 %v261
        %288 = vmatprep.subr.mxu0 0.0
        %289 = vmatpush1.msra.mxu0 %v262
        %290 = vmatprep.subr.mxu0 0.0
        %291 = vmatpush1.msra.mxu0 %v263
        %292 = vmatprep.subr.mxu0 0.0
        %293 = vmatpush1.msra.mxu0 %v264
        %294 = vmatprep.subr.mxu0 0.0
        %295 = vmatpush1.msra.mxu0 %v265
        %296 = vmatprep.subr.mxu0 0.0
        %297 = vmatpush1.msra.mxu0 %v266
        %298 = vmatprep.subr.mxu0 0.0
        %299 = vmatpush1.msra.mxu0 %v267
        %300 = vmatprep.subr.mxu0 0.0
        %301 = vmatpush1.msra.mxu0 0.0
        %302 = vmatprep.subr.mxu0 0.0
        %303 = vmatpush1.msra.mxu0 0.0
        %304 = vmatprep.subr.mxu0 0.0
        %305 = vmatpush1.msra.mxu0 0.0
        %306 = vmatprep.subr.mxu0 0.0
        %307 = vmatpush1.msra.mxu0 0.0
        %308 = vmatprep.subr.mxu0 0.0
        %309 = vmatpush1.msra.mxu0 0.0
        %310 = vmatprep.subr.mxu0 0.0
        %311 = vmatpush1.msra.mxu0 0.0
        %312 = vmatprep.subr.mxu0 0.0
        %313 = vmatpush1.msra.mxu0 0.0
        %314 = vmatprep.subr.mxu0 0.0
        %315 = vmatpush1.msra.mxu0 0.0
        %316 = vmatprep.subr.mxu0 0.0
        %317 = vmatpush1.msra.mxu0 0.0
        %318 = vmatprep.subr.mxu0 0.0
        %319 = vmatpush1.msra.mxu0 0.0
        %320 = vmatprep.subr.mxu0 0.0
        %321 = vmatpush1.msra.mxu0 0.0
        %322 = vmatprep.subr.mxu0 0.0
        %323 = vmatpush1.msra.mxu0 0.0
        %324 = vmatprep.subr.mxu0 0.0
        %325 = vmatpush1.msra.mxu0 0.0
        %326 = vmatprep.subr.mxu0 0.0
        %327 = vmatpush1.msra.mxu0 0.0
        %328 = vmatprep.subr.mxu0 0.0
        %329 = vmatpush1.msra.mxu0 0.0
        %330 = vmatprep.subr.mxu0 0.0
        %331 = vmatpush1.msra.mxu0 0.0
        %332 = vmatprep.mubr.f32.mxu0 0.0
        %333 = vmatmul.mubr.f32.gmra.mrb[0].mxu0 %v251
        %v334 = vpop.f32.mrb[0].mxu0
        %v335 = vadd.f32 0.0, %v334
        %v336 = vpop.f32.mrb[0].mxu0
        %337 = vdwg.mxu0
        %p338 = scmp.eq.s32.totalorder %s28, 0
        // Predicated region
        $region41: #{tpu_custom_call.1} parent=31 // pred_check
          %p339 = pneg %p338
        $region42: #{tpu_custom_call.1} parent=31 // pred_check_branch
          %341 = sbr.rel (%p339) target = $region44
        $region43: #{tpu_custom_call.1} parent=31 // pred_region
          %342 = vst [vmem:[#allocation2] sm:$0xff] %v335
        $region44: #{tpu_custom_call.1} parent=31 // pred_fallthru
          _
        %p343 = scmp.gt.s32.totalorder %s28, 0
        // Predicated region
        $region45: #{tpu_custom_call.1} parent=31 // pred_check
          %p344 = pneg %p343
        $region46: #{tpu_custom_call.1} parent=31 // pred_check_branch
          %346 = sbr.rel (%p344) target = $region48
        $region47: #{tpu_custom_call.1} parent=31 // pred_region
          %v347 = vld [vmem:[#allocation2] sm:$0xff]
          %v348 = vadd.f32 %v347, %v335
          %349 = vst [vmem:[#allocation2] sm:$0xff] %v348
        $region48: #{tpu_custom_call.1} parent=31 // pred_fallthru
          _
        // Predicated region
        $region49: #{tpu_custom_call.1} parent=31 // pred_check
          %p350 = pneg %p338
        $region50: #{tpu_custom_call.1} parent=31 // pred_check_branch
          %352 = sbr.rel (%p350) target = $region52
        $region51: #{tpu_custom_call.1} parent=31 // pred_region
          %v353 = vld [vmem:[#allocation2] sm:$0xff]
          %v354 = vld [vmem:[%s250] sm:$0x1]
          %v356 = vlaneseq
          %v357 = vshrl.u32 %v356, 7
          %v358 = vsub.s32 0, %v357
          %v359 = vrot.slane %v354, %v358
          %v361 = vadd.f32 %v353, %v359
          %362 = vst [vmem:[%s246] sm:$0xff] %v361
        $region52: #{tpu_custom_call.1} parent=31 // pred_fallthru
          _
        %s363 = sand.u32 %s132, 1
        %s364 = scalar_lea.sflag [#allocation5], %s363
        %s365 = sand.u32 %s132, 1
        %s366 = smul.addr %s365, 8
        %s367 = scalar_lea.vmem [#allocation8], %s366
        // Predicated region
        $region53: #{tpu_custom_call.1} parent=31 // pred_check
          %p368 = pneg %p142
        $region54: #{tpu_custom_call.1} parent=31 // pred_check_branch
          %370 = sbr.rel (%p368) target = $region56
        $region55: #{tpu_custom_call.1} parent=31 // pred_region
          %s372 = ssub.s32 128, 128
          %373 = vsyncadd %s364, %s372
          %s374 = sadd.s32 %s27, %s26
          %s375 = smul.addr %s374, 128
          %s376 = scalar_lea.hbm %s3, %s375
          %s378 = sshll.u32 %s367, 4
          %s379 = int_to_ptr.vmem [resolvable:$true] %s378
          %381 = dma.vmem_to_hbm [thread:$0]  %s379, 128, %s376, %s364
        $region56: #{tpu_custom_call.1} parent=31 // pred_fallthru
          _
      $region32: #{tpu_custom_call.1} parent=5 // pred_fallthru
        _
      %p382 = scmp.le.s32.totalorder 2, %s16
      // Predicated region
      $region57: #{tpu_custom_call.1} parent=5 // pred_check
        %p383 = pneg %p382
      $region58: #{tpu_custom_call.1} parent=5 // pred_check_branch
        %385 = sbr.rel (%p383) target = $region60
      $region59: #{tpu_custom_call.1} parent=5 // pred_region
        %s386 = ssub.s32 %s16, 2
        // Predicated region
        $region61: #{tpu_custom_call.1} parent=59 // pred_check
          %p387 = pneg %p148
        $region62: #{tpu_custom_call.1} parent=59 // pred_check_branch
          %389 = sbr.rel (%p387) target = $region64
        $region63: #{tpu_custom_call.1} parent=59 // pred_region
          %s390 = sand.u32 %s133, 1
          %s391 = scalar_lea.sflag [#allocation5], %s390
          %s392 = sand.u32 %s133, 1
          %s393 = smul.addr %s392, 8
          %s394 = scalar_lea.vmem [#allocation8], %s393
          %395 = dma.done %s391, 128
        $region64: #{tpu_custom_call.1} parent=59 // pred_fallthru
          _
      $region60: #{tpu_custom_call.1} parent=5 // pred_fallthru
        _
    $region6: #{tpu_custom_call.1} parent=1 // loop_footer
      %s20 = sadd.s32 1, %s16
    $region7: #{tpu_custom_call.1} parent=1 // loop_footer_branch
      %15 = sbr.rel target = $region3
    $region8: #{tpu_custom_call.1} parent=1 // loop_exit
      _
    %396 = vsyncpa [#allocation4], 1
    %s397 = scalar_lea.sflag [#allocation4], 1
    %398 = vsyncpa %s397, 1
    %399 = vsyncpa [#allocation7], 1
    %400 = vsyncpa [#allocation5], 1
    %s401 = scalar_lea.sflag [#allocation5], 1
    %402 = vsyncpa %s401, 1

</llo_original>
